<compile_context>
chip_gen: v7x
topology: tpu7x:2x2x1
jax: 0.10.0
libtpu: 0.0.40
codegen_flags: <defaults>
</compile_context>

<pallas_src>
import jax
import jax.numpy as jnp
from jax.experimental import pallas as pl
from jax.experimental.pallas import tpu as pltpu

_LANE = 128
_SUBLANE = 8
_BLOCK_BYTES = 2 * 1024 * 1024   # per-block budget: 2 arrays x 2 buffers x 2 MiB = 8 MiB
_ROW_SEG_BYTES = 8 * 1024        # target contiguous bytes per row (wide-lane bias)


def _chomp_kernel(x_ref, o_ref):
    # Full-width path: trims the chomped tail in-kernel.
    # Lane-tiled path: blocks are identical, so the slice is a no-op copy.
    o_ref[...] = x_ref[:, : o_ref.shape[-1]]


def chomp1d(x: jax.Array, chomp_size: int) -> jax.Array:
    """Equivalent of Chomp1d(chomp_size)(x) for x of shape (N, C, L)."""
    assert x.ndim == 3, "expected (N, C, L) input"
    n, c, l = x.shape
    if chomp_size == 0:
        # Strict PyTorch semantics: x[:, :, :-0] == x[:, :, :0] -> empty tail.
        return x[:, :, :0]
    assert 0 < chomp_size < l, "chomp_size must be in (0, L)"
    l_out = l - chomp_size

    itemsize = jnp.dtype(x.dtype).itemsize
    rows = n * c
    # Collapse (N, C) into one sublane-dense rows axis; free since only the
    # last axis is being sliced.
    x2 = x.reshape(rows, l)

    def _row_tile(width_elems: int) -> int:
        cap = max(1, _BLOCK_BYTES // max(1, width_elems * itemsize))
        if rows <= cap:
            return rows                       # full extent: always legal
        return max(_SUBLANE, (cap // _SUBLANE) * _SUBLANE)

    # Path A (full-width trim): read (tile_r, L), write (tile_r, l_out).
    # No masked lane blocks; the extra HBM read is chomp/L. Preferred when the
    # waste is small, and mandatory when l_out < 128 (lane tiling impossible).
    full_width_fits = (min(rows, _SUBLANE) * l * itemsize) <= _BLOCK_BYTES
    prefer_full = full_width_fits and (l_out < _LANE or 4 * chomp_size <= l)

    if prefer_full:
        tile_l_in, tile_l_out = l, l_out
        tile_r = _row_tile(l)
        lane_blocks = 1
        read_elems = rows * l
    else:
        # Path B (lane-tiled DMA chomp): identical in/out blocks; the index_map
        # simply never visits the chomped tail. Wide-lane biased tiles.
        wide_target = max(_LANE, (_ROW_SEG_BYTES // itemsize // _LANE) * _LANE)
        tile_l = min(max(_LANE, (l_out // _LANE) * _LANE), wide_target)
        tile_l_in = tile_l_out = tile_l
        tile_r = _row_tile(tile_l)
        lane_blocks = pl.cdiv(l_out, tile_l)
        read_elems = rows * l_out

    # Row-axis grid: if the budget already split rows, use that; otherwise, for
    # sizeable row counts split once so v7x's two TensorCores both get work.
    if rows > tile_r:
        row_blocks = pl.cdiv(rows, tile_r)
    elif rows >= 1024:
        tile_r = ((pl.cdiv(rows, 2) + _SUBLANE - 1) // _SUBLANE) * _SUBLANE
        row_blocks = pl.cdiv(rows, tile_r)
    else:
        row_blocks = 1

    out2 = pl.pallas_call(
        _chomp_kernel,
        out_shape=jax.ShapeDtypeStruct((rows, l_out), x.dtype),
        grid_spec=pltpu.PrefetchScalarGridSpec(
            num_scalar_prefetch=0,
            grid=(row_blocks, lane_blocks),
            in_specs=[pl.BlockSpec((tile_r, tile_l_in), lambda i, j: (i, j))],
            out_specs=pl.BlockSpec((tile_r, tile_l_out), lambda i, j: (i, j)),
        ),
        compiler_params=pltpu.CompilerParams(
            dimension_semantics=("parallel", "parallel"),
        ),
        cost_estimate=pl.CostEstimate(
            flops=0,
            transcendentals=0,
            bytes_accessed=(read_elems + rows * l_out) * itemsize,
        ),
    )(x2)
    return out2.reshape(n, c, l_out)


if __name__ == "__main__":
    key = jax.random.PRNGKey(0)

    # Small shape consistent with a 1-D temporal conv activation: (N, C, L).
    N, C, L = 2, 4, 16
    chomp_size = 4  # e.g. (kernel_size - 1) * dilation padding being chomped
    x = jax.random.normal(key, (N, C, L), dtype=jnp.float32)

    out = jax.block_until_ready(chomp1d(x, chomp_size))
    ref = x[:, :, :-chomp_size]
    assert out.shape == (N, C, L - chomp_size), out.shape
    assert out.dtype == x.dtype
    assert jnp.array_equal(out, ref), "mismatch vs reference (full-width path)"

    # Longer sequence, small chomp -> still the full-width (no-masked-tail) path.
    k1 = jax.random.PRNGKey(1)
    x1 = jax.random.normal(k1, (2, 4, 300), dtype=jnp.float32)
    out1 = jax.block_until_ready(chomp1d(x1, 4))
    assert out1.shape == (2, 4, 296), out1.shape
    assert jnp.array_equal(out1, x1[:, :, :-4]), "mismatch (full-width, L=300)"

    # Large chomp fraction -> exercises the lane-tiled DMA-chomp path.
    k2 = jax.random.PRNGKey(2)
    x2 = jax.random.normal(k2, (2, 4, 1024), dtype=jnp.float32)
    out2 = jax.block_until_ready(chomp1d(x2, 512))
    assert out2.shape == (2, 4, 512), out2.shape
    assert jnp.array_equal(out2, x2[:, :, :-512]), "mismatch (lane-tiled path)"

    print("KERNEL_OK")
</pallas_src>

<mosaic_0001>
module attributes {stable_mosaic.version = 11 : i64} {
  func.func @_chomp_kernel(%arg0: i32, %arg1: i32, %arg2: memref<8x16xf32, #tpu.memory_space<vmem>>, %arg3: memref<8x12xf32, #tpu.memory_space<vmem>>) attributes {dimension_semantics = [#tpu.dimension_semantics<parallel>, #tpu.dimension_semantics<parallel>], iteration_bounds = array<i64: 1, 1>, scalar_prefetch = 0 : i64, scratch_operands = 0 : i64, tpu.core_type = #tpu.core_type<tc>, window_params = [{transform_indices = @transform_0, window_bounds = array<i64: 8, 16>}, {transform_indices = @transform_1, window_bounds = array<i64: 8, 12>}]} {
    %c0 = arith.constant 0 : index
    %c0_0 = arith.constant 0 : index
    %0 = vector.load %arg2[%c0, %c0_0] : memref<8x16xf32, #tpu.memory_space<vmem>>, vector<8x12xf32>
    %c0_1 = arith.constant 0 : index
    %c0_2 = arith.constant 0 : index
    %1 = vector.load %arg3[%c0_1, %c0_2] : memref<8x12xf32, #tpu.memory_space<vmem>>, vector<8x12xf32>
    tpu.vector_store %arg3[%c0_1, %c0_2], %0 {strides = array<i32>} : memref<8x12xf32, #tpu.memory_space<vmem>>, vector<8x12xf32>,
    return
  }
  func.func @transform_0(%arg0: i32, %arg1: i32) -> (i32, i32) {
    %c0_i32 = arith.constant 0 : i32
    return %arg0, %arg1 : i32, i32
  }
  func.func @transform_1(%arg0: i32, %arg1: i32) -> (i32, i32) {
    %c0_i32 = arith.constant 0 : i32
    return %arg0, %arg1 : i32, i32
  }
}

</mosaic_0001>

<llo_original>
// kernel: tpu_custom_call.1
$region0: #{tpu_custom_call.1}
  #allocation0 [shape = 'u32[]', space=smem, size = 0x4, offset = 0x4, fixed_abs, tag = 'smem constant byte address 0x4 - core index']
  #allocation1 [shape = 'u32[144,128]{1,0:T(1,128)}', space=vmem, size = 0x12000, scoped, tag = 'internal scratch']
  %s0 = inlined_call_operand.hbm [shape: f32[8,16], index: 0, kind: input, shape index: {}]
  %s1 = inlined_call_operand.hbm [shape: f32[8,12], index: 1, kind: output, shape index: {}]
  %s2 = sld [smem:[#allocation0]]
  $region18: #{tpu_custom_call.1} parent=0
    _
  %s4 = ssub.s32 1, %s2
  %s5 = scalar_select 0, %s4, %s2
  $region1: #{tpu_custom_call.1} parent=0
    #allocation2 [shape = 'u8[4096]{0}', space=vmem, size = 0x1000, scoped, tag = 'input window, operand 0, single buffered']
    #allocation3 [shape = 's32[1]{0}', space=sflag, size = 0x4, scoped, tag = 'scoped memory for tpu_custom_call.1']
    #allocation4 [shape = 's32[1]{0}', space=sflag, size = 0x4, scoped, tag = 'scoped memory for tpu_custom_call.1']
    #allocation5 [shape = 'u8[4096]{0}', space=vmem, size = 0x1000, scoped, tag = 'output window, operand 0, single buffered']
    %6 = vsyncpa [#allocation3], 0
    %7 = vsyncpa [#allocation4], 0
    // Predicated region
    $region2: #{tpu_custom_call.1} parent=1 // pred_check
      _
    $region3: #{tpu_custom_call.1} parent=1 // pred_check_branch
      %9 = sbr.rel (0) target = $region5
    $region4: #{tpu_custom_call.1} parent=1 // pred_region
      %s11 = ssub.s32 128, 128
      %12 = vsyncadd [#allocation3], %s11
      %s14 = sshll.u32 [#allocation2], 4
      %s15 = int_to_ptr.vmem [resolvable:$true] %s14
      %17 = dma.hbm_to_vmem [thread:$0]  %s0, 128, %s15, [#allocation3]
    $region5: #{tpu_custom_call.1} parent=1 // pred_fallthru
      _
    // Predicated region
    $region6: #{tpu_custom_call.1} parent=1 // pred_check
      _
    $region7: #{tpu_custom_call.1} parent=1 // pred_check_branch
      %19 = sbr.rel (0) target = $region9
    $region8: #{tpu_custom_call.1} parent=1 // pred_region
      %20 = dma.done [#allocation3], 128
    $region9: #{tpu_custom_call.1} parent=1 // pred_fallthru
      _
    %v21 = vld [vmem:[#allocation2] sm:$0xff]
    %vm22 = vcmask 97280
    %23 = vst.msk [vmem:[#allocation5] sm:$0xff] %vm22, %v21
    // Predicated region
    $region10: #{tpu_custom_call.1} parent=1 // pred_check
      _
    $region11: #{tpu_custom_call.1} parent=1 // pred_check_branch
      %25 = sbr.rel (0) target = $region13
    $region12: #{tpu_custom_call.1} parent=1 // pred_region
      %s27 = ssub.s32 128, 128
      %28 = vsyncadd [#allocation4], %s27
      %s30 = sshll.u32 [#allocation5], 4
      %s31 = int_to_ptr.vmem [resolvable:$true] %s30
      %33 = dma.vmem_to_hbm [thread:$0]  %s31, 128, %s1, [#allocation4]
    $region13: #{tpu_custom_call.1} parent=1 // pred_fallthru
      _
    // Predicated region
    $region14: #{tpu_custom_call.1} parent=1 // pred_check
      _
    $region15: #{tpu_custom_call.1} parent=1 // pred_check_branch
      %35 = sbr.rel (0) target = $region17
    $region16: #{tpu_custom_call.1} parent=1 // pred_region
      %36 = dma.done [#allocation4], 128
    $region17: #{tpu_custom_call.1} parent=1 // pred_fallthru
      _
    %37 = vsyncpa [#allocation3], 1
    %38 = vsyncpa [#allocation4], 1

</llo_original>
